<compile_context>
chip_gen: v7x
topology: tpu7x:2x2x1
jax: 0.10.0
libtpu: 0.0.40
codegen_flags: <defaults>
</compile_context>

<pallas_src>
import jax
import jax.numpy as jnp
from jax.experimental import pallas as pl
from jax.experimental.pallas import tpu as pltpu


_TARGET_BLOCK_BYTES = 4 * 1024 * 1024     # ~4 MiB per x/out block (2-8 MiB sweet spot)
_VMEM_LIMIT_BYTES = 32 * 1024 * 1024      # explicit scoped-VMEM limit (safe on v5e/v6e/v7x)


# ---------------------------------------------------------------------------
# Kernel bodies: pure elementwise add; pe broadcast over batch via BlockSpec.
# ---------------------------------------------------------------------------
def _posenc_kernel_3d(x_ref, pe_ref, o_ref):
    # x_ref : (b_tile, s_tile, D)   pe_ref: (1, s_tile, D)   o_ref: like x_ref
    o_ref[...] = x_ref[...] + pe_ref[...]


def _posenc_kernel_2d(x_ref, pe_ref, o_ref):
    # x_ref : (b_tile, n_tile)      pe_ref: (1, n_tile)      o_ref: like x_ref
    o_ref[...] = x_ref[...] + pe_ref[...]


# ---------------------------------------------------------------------------
# PE table construction (matches the PyTorch buffer; odd-d_model safe).
# ---------------------------------------------------------------------------
def make_sinusoidal_pe(max_seq_len, d_model, dtype=jnp.float32):
    pos = jnp.arange(max_seq_len, dtype=jnp.float32)[:, None]        # (L, 1)
    two_i = jnp.arange(0, d_model, 2, dtype=jnp.float32)             # (ceil(D/2),)
    div_term = jnp.power(10000.0, two_i / float(d_model))
    ang = pos / div_term                                             # (L, ceil(D/2))
    pe = jnp.zeros((max_seq_len, d_model), jnp.float32)
    pe = pe.at[:, 0::2].set(jnp.sin(ang))
    pe = pe.at[:, 1::2].set(jnp.cos(ang)[:, : d_model // 2])         # odd-D safe
    return pe[None].astype(dtype)                                    # (1, L, D)


# ---------------------------------------------------------------------------
# Byte-aware tile selection helpers (trace-time Python only).
# ---------------------------------------------------------------------------
def _divisors(n):
    ds = set()
    i = 1
    while i * i <= n:
        if n % i == 0:
            ds.add(i)
            ds.add(n // i)
        i += 1
    return sorted(ds)


def _pick_tiles_2d(B, N, itemsize, target):
    """Legal 2D tiles: b_tile in {B} U {mult-of-8 divisors}, n_tile in {N} U {mult-of-128 divisors}."""
    b_cands = sorted({B} | {d for d in _divisors(B) if d % 8 == 0})
    n_cands = sorted({N} | {d for d in _divisors(N) if d % 128 == 0})
    best_score, best = None, None
    for b in b_cands:
        for n in n_cands:
            nbytes = b * n * itemsize
            score = (nbytes > target, abs(nbytes - target), -n, -b)
            if best_score is None or score < best_score:
                best_score, best = score, (b, n)
    return best


def _pick_tiles_3d(B, S, D, itemsize, sublane, target):
    """Legal 3D tiles: s_tile in {S} U {mult-of-sublane divisors}; b_tile any divisor of B."""
    s_cands = sorted({S} | {d for d in _divisors(S) if d % sublane == 0})
    b_cands = _divisors(B)
    row_bytes = D * itemsize
    best_score, best = None, None
    for b in b_cands:
        for s in s_cands:
            nbytes = b * s * row_bytes
            score = (nbytes > target, abs(nbytes - target), -s, -b)
            if best_score is None or score < best_score:
                best_score, best = score, (b, s)
    return best


# ---------------------------------------------------------------------------
# Wrapper
# ---------------------------------------------------------------------------
def positional_encoding(x, pe):
    """out = dropout(x + pe[:, :S])   (dropout in eval mode == identity).

    x : (B, S, D);  pe : (1, L, D) with L >= S.
    """
    B, S, D = x.shape
    assert pe.shape[0] == 1 and pe.shape[2] == D and pe.shape[1] >= S
    pe = pe[:, :S, :].astype(x.dtype)          # slice + match dtype (no in-kernel convert)

    itemsize = jnp.dtype(x.dtype).itemsize
    sublane = {4: 8, 2: 16, 1: 32}.get(itemsize, 8)

    if D % 128 == 0:
        # 3-D path: (b_tile, s_tile, D) blocks; D stays lane-dense.
        b_tile, s_tile = _pick_tiles_3d(B, S, D, itemsize, sublane, _TARGET_BLOCK_BYTES)
        grid = (S // s_tile, B // b_tile)       # slow = seq (pe-varying), fast = batch
        kernel = _posenc_kernel_3d
        in_specs = [
            pl.BlockSpec((b_tile, s_tile, D), lambda s, b: (b, s, 0)),   # x
            pl.BlockSpec((1, s_tile, D),      lambda s, b: (0, s, 0)),   # pe (batch-invariant)
        ]
        out_spec = pl.BlockSpec((b_tile, s_tile, D), lambda s, b: (b, s, 0))
        out_shape = jax.ShapeDtypeStruct((B, S, D), x.dtype)
        x_block_bytes = b_tile * s_tile * D * itemsize
        pe_block_bytes = s_tile * D * itemsize
        call_args = (x, pe)
        reshape_back = False
    else:
        # 2-D flattened path: d_model is not a multiple of 128, so present a
        # lane-dense (multiple-of-128 or full-extent) last dim.  The add is
        # layout-agnostic and pe flattens identically, so correctness holds.
        N = S * D
        x2 = x.reshape(B, N)
        pe2 = pe.reshape(1, N)
        b_tile, n_tile = _pick_tiles_2d(B, N, itemsize, _TARGET_BLOCK_BYTES)
        grid = (N // n_tile, B // b_tile)       # slow = columns (pe-varying), fast = batch
        kernel = _posenc_kernel_2d
        in_specs = [
            pl.BlockSpec((b_tile, n_tile), lambda n, b: (b, n)),         # x
            pl.BlockSpec((1, n_tile),      lambda n, b: (0, n)),         # pe (batch-invariant)
        ]
        out_spec = pl.BlockSpec((b_tile, n_tile), lambda n, b: (b, n))
        out_shape = jax.ShapeDtypeStruct((B, N), x.dtype)
        x_block_bytes = b_tile * n_tile * itemsize
        pe_block_bytes = n_tile * itemsize
        call_args = (x2, pe2)
        reshape_back = True

    # Double-buffered footprint: 2 x (x block + out block) + 2 x pe block.
    footprint = 2 * (2 * x_block_bytes + pe_block_bytes)
    vmem_limit = max(_VMEM_LIMIT_BYTES, int(footprint * 1.5))

    out = pl.pallas_call(
        kernel,
        out_shape=out_shape,
        grid=grid,
        in_specs=in_specs,
        out_specs=out_spec,
        compiler_params=pltpu.CompilerParams(
            dimension_semantics=("parallel", "parallel"),
            vmem_limit_bytes=vmem_limit),
    )(*call_args)

    return out.reshape(B, S, D) if reshape_back else out


if __name__ == "__main__":
    B, S, d_model, max_seq_len = 2, 8, 32, 16

    key = jax.random.PRNGKey(0)
    x = jax.random.normal(key, (B, S, d_model), jnp.float32)

    pe = make_sinusoidal_pe(max_seq_len, d_model)   # registered-buffer equivalent

    out = positional_encoding(x, pe)
    out = jax.block_until_ready(out)

    # Pure-JAX reference mirroring the PyTorch forward (eval mode: dropout = id).
    ref = x + pe[:, :S, :]
    assert out.shape == (B, S, d_model)
    assert jnp.allclose(out, ref, atol=1e-6, rtol=1e-6), "mismatch vs JAX reference"
    print("KERNEL_OK")
</pallas_src>

<mosaic_0001>
module attributes {stable_mosaic.version = 11 : i64} {
  func.func @_posenc_kernel_2d(%arg0: i32, %arg1: i32, %arg2: memref<2x256xf32, #tpu.memory_space<vmem>>, %arg3: memref<1x256xf32, #tpu.memory_space<vmem>>, %arg4: memref<2x256xf32, #tpu.memory_space<vmem>>) attributes {dimension_semantics = [#tpu.dimension_semantics<parallel>, #tpu.dimension_semantics<parallel>], iteration_bounds = array<i64: 1, 1>, scalar_prefetch = 0 : i64, scratch_operands = 0 : i64, tpu.core_type = #tpu.core_type<tc>, window_params = [{transform_indices = @transform_0, window_bounds = array<i64: 2, 256>}, {transform_indices = @transform_1, window_bounds = array<i64: 1, 256>}, {transform_indices = @transform_2, window_bounds = array<i64: 2, 256>}]} {
    %c0 = arith.constant 0 : index
    %c0_0 = arith.constant 0 : index
    %0 = vector.load %arg2[%c0, %c0_0] : memref<2x256xf32, #tpu.memory_space<vmem>>, vector<2x256xf32>
    %c0_1 = arith.constant 0 : index
    %c0_2 = arith.constant 0 : index
    %1 = vector.load %arg3[%c0_1, %c0_2] : memref<1x256xf32, #tpu.memory_space<vmem>>, vector<1x256xf32>
    %2 = vector.broadcast %1 : vector<1x256xf32> to vector<2x256xf32>
    %3 = arith.addf %0, %2 : vector<2x256xf32>
    %c0_3 = arith.constant 0 : index
    %c0_4 = arith.constant 0 : index
    %4 = vector.load %arg4[%c0_3, %c0_4] : memref<2x256xf32, #tpu.memory_space<vmem>>, vector<2x256xf32>
    tpu.vector_store %arg4[%c0_3, %c0_4], %3 {strides = array<i32>} : memref<2x256xf32, #tpu.memory_space<vmem>>, vector<2x256xf32>,
    return
  }
  func.func @transform_0(%arg0: i32, %arg1: i32) -> (i32, i32) {
    %c0_i32 = arith.constant 0 : i32
    return %arg1, %arg0 : i32, i32
  }
  func.func @transform_1(%arg0: i32, %arg1: i32) -> (i32, i32) {
    %c0_i32 = arith.constant 0 : i32
    %c0_i32_0 = arith.constant 0 : i32
    return %c0_i32, %arg0 : i32, i32
  }
  func.func @transform_2(%arg0: i32, %arg1: i32) -> (i32, i32) {
    %c0_i32 = arith.constant 0 : i32
    return %arg1, %arg0 : i32, i32
  }
}

</mosaic_0001>

<llo_original>
// kernel: tpu_custom_call.1
$region0: #{tpu_custom_call.1}
  #allocation0 [shape = 'u32[]', space=smem, size = 0x4, offset = 0x4, fixed_abs, tag = 'smem constant byte address 0x4 - core index']
  #allocation1 [shape = 'u32[144,128]{1,0:T(1,128)}', space=vmem, size = 0x12000, scoped, tag = 'internal scratch']
  %s0 = inlined_call_operand.hbm [shape: f32[2,256], index: 0, kind: input, shape index: {}]
  %s1 = inlined_call_operand.vmem [shape: f32[1,256], index: 1, kind: input, shape index: {}]
  %s2 = inlined_call_operand.hbm [shape: f32[2,256], index: 2, kind: output, shape index: {}]
  %s3 = sld [smem:[#allocation0]]
  $region22: #{tpu_custom_call.1} parent=0
    _
  %s5 = ssub.s32 1, %s3
  %s6 = scalar_select 0, %s5, %s3
  $region1: #{tpu_custom_call.1} parent=0
    #allocation2 [shape = 'u8[2048]{0}', space=vmem, size = 0x800, scoped, tag = 'input window, operand 0, single buffered']
    #allocation3 [shape = 's32[1]{0}', space=sflag, size = 0x4, scoped, tag = 'scoped memory for tpu_custom_call.1']
    #allocation4 [shape = 's32[1]{0}', space=sflag, size = 0x4, scoped, tag = 'scoped memory for tpu_custom_call.1']
    #allocation5 [shape = 'u8[2048]{0}', space=vmem, size = 0x800, scoped, tag = 'output window, operand 0, single buffered']
    %7 = vsyncpa [#allocation3], 0
    %8 = vsyncpa [#allocation4], 0
    // Predicated region
    $region2: #{tpu_custom_call.1} parent=1 // pred_check
      _
    $region3: #{tpu_custom_call.1} parent=1 // pred_check_branch
      %10 = sbr.rel (0) target = $region5
    $region4: #{tpu_custom_call.1} parent=1 // pred_region
      %s12 = ssub.s32 64, 64
      %13 = vsyncadd [#allocation3], %s12
      %s15 = sshll.u32 [#allocation2], 4
      %s16 = int_to_ptr.vmem [resolvable:$true] %s15
      %18 = dma.hbm_to_vmem [thread:$0]  %s0, 64, %s16, [#allocation3]
    $region5: #{tpu_custom_call.1} parent=1 // pred_fallthru
      _
    // Predicated region
    $region6: #{tpu_custom_call.1} parent=1 // pred_check
      _
    $region7: #{tpu_custom_call.1} parent=1 // pred_check_branch
      %20 = sbr.rel (0) target = $region9
    $region8: #{tpu_custom_call.1} parent=1 // pred_region
      _
    $region9: #{tpu_custom_call.1} parent=1 // pred_fallthru
      _
    // Predicated region
    $region10: #{tpu_custom_call.1} parent=1 // pred_check
      _
    $region11: #{tpu_custom_call.1} parent=1 // pred_check_branch
      %22 = sbr.rel (0) target = $region13
    $region12: #{tpu_custom_call.1} parent=1 // pred_region
      %23 = dma.done [#allocation3], 64
    $region13: #{tpu_custom_call.1} parent=1 // pred_fallthru
      _
    %v24 = vld [vmem:[#allocation2] sm:$0xf]
    %v25 = vld [vmem:[%s1] sm:$0x3]
    %v27 = vlaneseq
    %v28 = vshrl.u32 %v27, 7
    %v29 = vsub.s32 0, %v28
    %v30 = vrot.slane %v25, %v29
    %v31 = vlaneseq
    %v32 = vshrl.u32 %v31, 7
    %v33 = vsub.s32 1, %v32
    %v34 = vrot.slane %v25, %v33
    %v35 = vcombine.low %v30, %v34
    %v37 = vunpack.c.l.s4 1983009808
    %v38 = vunpack.c.0.s8 %v37
    %v39 = vlaneseq
    %v40 = vshrl.u32 %v39, 7
    %v41 = vsub.s32 %v38, %v40
    %v42 = vrot.slane %v35, %v41
    %v44 = vadd.f32 %v24, %v42
    %45 = vst [vmem:[#allocation5] sm:$0xf] %v44
    // Predicated region
    $region14: #{tpu_custom_call.1} parent=1 // pred_check
      _
    $region15: #{tpu_custom_call.1} parent=1 // pred_check_branch
      %47 = sbr.rel (0) target = $region17
    $region16: #{tpu_custom_call.1} parent=1 // pred_region
      %s49 = ssub.s32 64, 64
      %50 = vsyncadd [#allocation4], %s49
      %s52 = sshll.u32 [#allocation5], 4
      %s53 = int_to_ptr.vmem [resolvable:$true] %s52
      %55 = dma.vmem_to_hbm [thread:$0]  %s53, 64, %s2, [#allocation4]
    $region17: #{tpu_custom_call.1} parent=1 // pred_fallthru
      _
    // Predicated region
    $region18: #{tpu_custom_call.1} parent=1 // pred_check
      _
    $region19: #{tpu_custom_call.1} parent=1 // pred_check_branch
      %57 = sbr.rel (0) target = $region21
    $region20: #{tpu_custom_call.1} parent=1 // pred_region
      %58 = dma.done [#allocation4], 64
    $region21: #{tpu_custom_call.1} parent=1 // pred_fallthru
      _
    %59 = vsyncpa [#allocation3], 1
    %60 = vsyncpa [#allocation4], 1

</llo_original>
